<compile_context>
chip_gen: v7x
topology: tpu7x:2x2x1
jax: 0.10.0
libtpu: 0.0.40
codegen_flags: <defaults>
</compile_context>

<pallas_src>
import numpy as np
import jax
import jax.numpy as jnp
from jax import lax
from jax.experimental import pallas as pl
from jax.experimental.pallas import tpu as pltpu

BN_EPS = 1e-5
LANE = 128


def _round_up(x, m):
    return (x + m - 1) // m * m


# ----------------------------------------------------------------------------
# Host-side dense matrices: bilinear upsample (align_corners=False) and the
# exact PyTorch AdaptiveAvgPool2d binning, so both become plain matmuls.
# ----------------------------------------------------------------------------
def _bilinear_matrix(out_size, in_size):
    M = np.zeros((out_size, in_size), np.float32)
    if in_size == 1:
        M[:, 0] = 1.0
        return M
    scale = in_size / out_size
    for i in range(out_size):
        src = max((i + 0.5) * scale - 0.5, 0.0)          # PyTorch align_corners=False
        i0 = min(int(np.floor(src)), in_size - 1)
        i1 = min(i0 + 1, in_size - 1)
        lam = src - i0
        M[i, i0] += 1.0 - lam
        M[i, i1] += lam
    return M


def _upsample_matrix(H, W, s):
    wh = _bilinear_matrix(H, s)                           # (H, s)
    ww = _bilinear_matrix(W, s)                           # (W, s)
    # U[(h*W+w), (a*s+b)] = wh[h,a] * ww[w,b]
    return np.einsum('ha,wb->hwab', wh, ww).reshape(H * W, s * s).astype(np.float32)


def _adaptive_pool_matrix(out_size, in_size):
    # PyTorch AdaptiveAvgPool: bin i covers [floor(i*In/Out), ceil((i+1)*In/Out))
    P = np.zeros((out_size, in_size), np.float32)
    for i in range(out_size):
        start = (i * in_size) // out_size
        end = -((-(i + 1) * in_size) // out_size)
        P[i, start:end] = 1.0 / (end - start)
    return P


def _shifted_upsample_matrix(H, W, bin_sizes):
    """U_big = concat over the 9 conv taps of the row-shifted upsample matrix.

    Column block t (t = (dy+1)*3 + (dx+1)) holds, for output pixel (h, w), the row
    U_all[(h+dy)*W + (w+dx)] when in-bounds and zeros otherwise -> reproduces the
    3x3 conv's zero ('same') padding.
    """
    Ktot = sum(s * s for s in bin_sizes)
    U_all = np.concatenate([_upsample_matrix(H, W, s) for s in bin_sizes], axis=1)
    U3 = U_all.reshape(H, W, Ktot)
    blocks = []
    for dy in (-1, 0, 1):
        for dx in (-1, 0, 1):
            blk = np.zeros((H, W, Ktot), np.float32)
            h0, h1 = max(0, -dy), min(H, H - dy)
            w0, w1 = max(0, -dx), min(W, W - dx)
            blk[h0:h1, w0:w1, :] = U3[h0 + dy:h1 + dy, w0 + dx:w1 + dx, :]
            blocks.append(blk.reshape(H * W, Ktot))
    return np.concatenate(blocks, axis=1)                 # (H*W, 9*Ktot)


# ----------------------------------------------------------------------------
# Deterministic parameter init (BN folded into conv weights, eval mode).
# ----------------------------------------------------------------------------
def init_sppm_params(key, in_ch, inter_ch, out_ch):
    ks = jax.random.split(key, 16)

    def bn_params(kb, c):
        k0, k1, k2, k3 = jax.random.split(kb, 4)
        g = 1.0 + 0.1 * jax.random.normal(k0, (c,), jnp.float32)
        b = 0.1 * jax.random.normal(k1, (c,), jnp.float32)
        m = 0.1 * jax.random.normal(k2, (c,), jnp.float32)
        v = 1.0 + 0.1 * jnp.abs(jax.random.normal(k3, (c,), jnp.float32))
        return g, b, m, v

    params = {}
    idx = 0
    for i in range(3):  # three 1x1 stage convs: in_ch -> inter_ch
        w = 0.2 * jax.random.normal(ks[idx], (in_ch, inter_ch), jnp.float32); idx += 1
        g, b, m, v = bn_params(ks[idx], inter_ch); idx += 1
        scale = g / jnp.sqrt(v + BN_EPS)
        params[f'stage{i + 1}'] = (w * scale[None, :], b - m * scale)

    # conv_out: 3x3, inter_ch -> out_ch, padding=1
    w = 0.2 * jax.random.normal(ks[idx], (3, 3, inter_ch, out_ch), jnp.float32); idx += 1
    g, b, m, v = bn_params(ks[idx], out_ch); idx += 1
    scale = g / jnp.sqrt(v + BN_EPS)
    params['conv_out'] = ((w * scale[None, None, None, :]).reshape(9, inter_ch, out_ch),
                          (b - m * scale).reshape(1, out_ch))
    return params


# ----------------------------------------------------------------------------
# Pallas kernel: per (batch-group, spatial-band) grid step
#   out[i] = relu( U_big_band @ G[i] + b )       (single MXU matmul per element)
# ----------------------------------------------------------------------------
def _make_kernel(Nb):
    def kernel(u_ref, g_ref, b_ref, o_ref):
        u = u_ref[...]                                   # (m_tile, Kbig) bf16
        b = b_ref[...]                                   # (1, Cop)       f32
        for i in range(Nb):                              # static unroll over batch block
            acc = jnp.dot(u, g_ref[i], preferred_element_type=jnp.float32)
            o_ref[i] = jnp.maximum(acc + b, 0.0).astype(o_ref.dtype)
    return kernel


def _pick_nb(N, hw):
    # batch several elements per grid step only when the spatial block is small
    cap = 8 if hw <= 1024 else 1
    nb = 1
    for d in range(1, min(N, cap) + 1):
        if N % d == 0:
            nb = d
    return nb


def _pick_m_tiling(hw):
    # spatial row-band tiling of the M = H*W axis ('parallel' -> v7x dual-TC)
    mp = _round_up(hw, 8)
    target = 2048
    if mp <= target:
        return mp, mp
    m_tile = target
    return _round_up(mp, m_tile), m_tile


# ----------------------------------------------------------------------------
# Forward wrapper (NCHW in / NCHW f32 out, like the PyTorch module).
# ----------------------------------------------------------------------------
def sppm_forward(x_nchw, params, bin_sizes):
    N, Cin, H, W = x_nchw.shape
    x = x_nchw.astype(jnp.float32)
    Cm = params['stage1'][0].shape[1]
    w9, b_out = params['conv_out']                       # (9, Cm, Co), (1, Co)
    Co = w9.shape[2]

    Ktot = sum(s * s for s in bin_sizes)
    Kraw = 9 * Ktot
    Kbig = _round_up(Kraw, LANE)                         # lane-dense contraction depth
    Cop = _round_up(Co, LANE)                            # lane-dense output channels
    MP, m_tile = _pick_m_tiling(H * W)
    Nb = _pick_nb(N, H * W)

    # ---- tiny plain-JAX glue: exact adaptive avg pools + 1x1 stage convs + G stacking ----
    f_parts = []
    for i, s in enumerate(bin_sizes):
        Ph = jnp.asarray(_adaptive_pool_matrix(s, H))
        Pw = jnp.asarray(_adaptive_pool_matrix(s, W))
        pooled = jnp.einsum('ah,bw,nchw->ncab', Ph, Pw, x)              # (N, Cin, s, s)
        w_eff, b_eff = params[f'stage{i + 1}']                          # (Cin, Cm), (Cm,)
        f = jnp.maximum(jnp.einsum('ncab,cd->nabd', pooled, w_eff) + b_eff, 0.0)
        f_parts.append(f.reshape(N, s * s, Cm))
    F_all = jnp.concatenate(f_parts, axis=1)                            # (N, Ktot, Cm) f32

    # fold the 3x3 conv weights into the contraction: G[n] = stack_t(F_all[n] @ W_t)
    G = jnp.einsum('nkc,tcd->ntkd', F_all, w9).reshape(N, Kraw, Co)
    G = jnp.pad(G, ((0, 0), (0, Kbig - Kraw), (0, Cop - Co))).astype(jnp.bfloat16)

    # fused (upsample + sum + 3x3-tap-shift) matrix, host-side constant, bf16
    U_np = _shifted_upsample_matrix(H, W, bin_sizes)                    # (H*W, 9*Ktot)
    U_np = np.pad(U_np, ((0, MP - H * W), (0, Kbig - Kraw)))
    U_big = jnp.asarray(U_np).astype(jnp.bfloat16)                      # (MP, Kbig)

    b_pad = jnp.pad(b_out, ((0, 0), (0, Cop - Co))).astype(jnp.float32)  # (1, Cop)

    kernel = _make_kernel(Nb)

    in_specs = [
        pl.BlockSpec((m_tile, Kbig), lambda n, m: (m, 0)),        # U_big (band-indexed)
        pl.BlockSpec((Nb, Kbig, Cop), lambda n, m: (n, 0, 0)),    # G     (batch-group)
        pl.BlockSpec((1, Cop), lambda n, m: (0, 0)),              # bias  (grid-invariant)
    ]
    out_spec = pl.BlockSpec((Nb, m_tile, Cop), lambda n, m: (n, m, 0))

    # ---- generation-aware, size-derived VMEM budget ----
    u_blk = m_tile * Kbig * 2
    g_blk = Nb * Kbig * Cop * 2
    o_blk = Nb * m_tile * Cop * 2
    b_blk = Cop * 4
    pipeline_bytes = 2 * (u_blk + g_blk + o_blk + b_blk)          # double-buffered blocks
    temp_bytes = Nb * m_tile * Cop * 4 + u_blk                    # f32 acc + loaded U tile
    needed = pipeline_bytes + temp_bytes
    try:
        phys_vmem = int(pltpu.get_tpu_info().vmem_capacity_bytes)
    except Exception:
        phys_vmem = 64 * 1024 * 1024                              # conservative (v7x/TC)
    vmem_cap = (phys_vmem * 3) // 4
    vmem_limit = int(min(max(2 * needed, 16 * 1024 * 1024), vmem_cap))

    flops = 2 * N * MP * Kbig * Cop
    bytes_accessed = int(U_big.size * 2 * (N // Nb) + G.size * 2
                         + b_pad.size * 4 + N * MP * Cop * 2)

    out = pl.pallas_call(
        kernel,
        out_shape=jax.ShapeDtypeStruct((N, MP, Cop), jnp.bfloat16),
        grid_spec=pltpu.PrefetchScalarGridSpec(
            num_scalar_prefetch=0,
            grid=(N // Nb, MP // m_tile),
            in_specs=in_specs,
            out_specs=out_spec,
        ),
        compiler_params=pltpu.CompilerParams(
            dimension_semantics=("parallel", "parallel"),
            vmem_limit_bytes=vmem_limit,
        ),
        cost_estimate=pl.CostEstimate(flops=flops, transcendentals=0,
                                      bytes_accessed=bytes_accessed),
    )(U_big, G, b_pad)

    out = out[:, :H * W, :Co].reshape(N, H, W, Co)
    return jnp.transpose(out, (0, 3, 1, 2)).astype(jnp.float32)   # NCHW f32, as in PyTorch


# ----------------------------------------------------------------------------
# Pure-JAX f32 reference (same math, unpadded, no conv folding) for correctness.
# ----------------------------------------------------------------------------
def sppm_reference(x_nchw, params, bin_sizes):
    N, Cin, H, W = x_nchw.shape
    x = x_nchw.astype(jnp.float32)
    Cm = params['stage1'][0].shape[1]
    total = jnp.zeros((N, H, W, Cm), jnp.float32)
    for i, s in enumerate(bin_sizes):
        Ph = jnp.asarray(_adaptive_pool_matrix(s, H))
        Pw = jnp.asarray(_adaptive_pool_matrix(s, W))
        pooled = jnp.einsum('ah,bw,nchw->nabc', Ph, Pw, x)              # (N, s, s, Cin)
        w_eff, b_eff = params[f'stage{i + 1}']
        f = jnp.maximum(jnp.einsum('nabc,cd->nabd', pooled, w_eff) + b_eff, 0.0)
        U = jnp.asarray(_upsample_matrix(H, W, s))
        up = jnp.einsum('pq,nqc->npc', U, f.reshape(N, s * s, Cm)).reshape(N, H, W, Cm)
        total = total + up
    w9, b_out = params['conv_out']
    Co = w9.shape[2]
    y = lax.conv_general_dilated(total, w9.reshape(3, 3, Cm, Co),
                                 window_strides=(1, 1), padding='SAME',
                                 dimension_numbers=('NHWC', 'HWIO', 'NHWC'))
    y = jnp.maximum(y + b_out.reshape(1, 1, 1, Co), 0.0)
    return jnp.transpose(y, (0, 3, 1, 2))


if __name__ == "__main__":
    key = jax.random.PRNGKey(0)
    k_x, k_p = jax.random.split(key)

    N, Cin, H, W = 2, 4, 16, 16
    inter_ch, out_ch = 8, 8
    bin_sizes = [1, 2, 4]

    x = jax.random.normal(k_x, (N, Cin, H, W), jnp.float32)
    params = init_sppm_params(k_p, Cin, inter_ch, out_ch)

    y = jax.block_until_ready(sppm_forward(x, params, bin_sizes))
    y_ref = sppm_reference(x, params, bin_sizes)
    # bf16 MXU operands / bf16 writeback (f32 accumulation) vs pure-f32 reference.
    np.testing.assert_allclose(np.asarray(y), np.asarray(y_ref), rtol=3e-2, atol=3e-2)

    # Non-divisible adaptive-pool bins (exercises the exact PyTorch binning path).
    bins_odd = [1, 2, 3]
    y2 = jax.block_until_ready(sppm_forward(x, params, bins_odd))
    y2_ref = sppm_reference(x, params, bins_odd)
    np.testing.assert_allclose(np.asarray(y2), np.asarray(y2_ref), rtol=3e-2, atol=3e-2)

    print("KERNEL_OK")
</pallas_src>

<mosaic_0001>
module attributes {stable_mosaic.version = 11 : i64} {
  func.func @kernel(%arg0: i32, %arg1: i32, %arg2: memref<256x256xbf16, #tpu.memory_space<vmem>>, %arg3: memref<2x256x128xbf16, #tpu.memory_space<vmem>>, %arg4: memref<1x128xf32, #tpu.memory_space<vmem>>, %arg5: memref<2x256x128xbf16, #tpu.memory_space<vmem>>) attributes {dimension_semantics = [#tpu.dimension_semantics<parallel>, #tpu.dimension_semantics<parallel>], iteration_bounds = array<i64: 1, 1>, scalar_prefetch = 0 : i64, scratch_operands = 0 : i64, tpu.core_type = #tpu.core_type<tc>, window_params = [{transform_indices = @transform_0, window_bounds = array<i64: 256, 256>}, {transform_indices = @transform_1, window_bounds = array<i64: 2, 256, 128>}, {pipeline_mode = #tpu.pipeline_mode<synchronous>, transform_indices = @transform_2, window_bounds = array<i64: 1, 128>}, {transform_indices = @transform_3, window_bounds = array<i64: 2, 256, 128>}]} {
    %c0 = arith.constant 0 : index
    %c0_0 = arith.constant 0 : index
    %0 = vector.load %arg2[%c0, %c0_0] : memref<256x256xbf16, #tpu.memory_space<vmem>>, vector<256x256xbf16>
    %c0_1 = arith.constant 0 : index
    %c0_2 = arith.constant 0 : index
    %1 = vector.load %arg4[%c0_1, %c0_2] : memref<1x128xf32, #tpu.memory_space<vmem>>, vector<1x128xf32>
    %c0_3 = arith.constant 0 : index
    %c0_4 = arith.constant 0 : index
    %c0_5 = arith.constant 0 : index
    %2 = vector.load %arg3[%c0_3, %c0_4, %c0_5] : memref<2x256x128xbf16, #tpu.memory_space<vmem>>, vector<1x256x128xbf16>
    %3 = vector.shape_cast %2 : vector<1x256x128xbf16> to vector<256x128xbf16>
    %cst = arith.constant dense<0.000000e+00> : vector<256x128xf32>
    %4 = tpu.matmul %0, %3, %cst {dimension_numbers = #tpu.dot_dimension_numbers<[1], [0], [0], [1], [0, 0, 1, 1], [], []>} : vector<256x256xbf16>, vector<256x128xbf16>, vector<256x128xf32> -> vector<256x128xf32>
    %5 = vector.broadcast %1 : vector<1x128xf32> to vector<256x128xf32>
    %6 = arith.addf %4, %5 : vector<256x128xf32>
    %cst_6 = arith.constant 0.000000e+00 : f32
    %7 = vector.broadcast %cst_6 : f32 to vector<256x128xf32>
    %8 = arith.maximumf %6, %7 : vector<256x128xf32>
    %9 = arith.truncf %8 : vector<256x128xf32> to vector<256x128xbf16>
    %c0_7 = arith.constant 0 : index
    %c0_8 = arith.constant 0 : index
    %c0_9 = arith.constant 0 : index
    %10 = vector.load %arg5[%c0_7, %c0_8, %c0_9] : memref<2x256x128xbf16, #tpu.memory_space<vmem>>, vector<1x256x128xbf16>
    %11 = vector.shape_cast %10 : vector<1x256x128xbf16> to vector<256x128xbf16>
    %12 = vector.shape_cast %9 : vector<256x128xbf16> to vector<1x256x128xbf16>
    tpu.vector_store %arg5[%c0_7, %c0_8, %c0_9], %12 {strides = array<i32>} : memref<2x256x128xbf16, #tpu.memory_space<vmem>>, vector<1x256x128xbf16>,
    %c1 = arith.constant 1 : index
    %c0_10 = arith.constant 0 : index
    %c0_11 = arith.constant 0 : index
    %13 = vector.load %arg3[%c1, %c0_10, %c0_11] : memref<2x256x128xbf16, #tpu.memory_space<vmem>>, vector<1x256x128xbf16>
    %14 = vector.shape_cast %13 : vector<1x256x128xbf16> to vector<256x128xbf16>
    %cst_12 = arith.constant dense<0.000000e+00> : vector<256x128xf32>
    %15 = tpu.matmul %0, %14, %cst_12 {dimension_numbers = #tpu.dot_dimension_numbers<[1], [0], [0], [1], [0, 0, 1, 1], [], []>} : vector<256x256xbf16>, vector<256x128xbf16>, vector<256x128xf32> -> vector<256x128xf32>
    %16 = vector.broadcast %1 : vector<1x128xf32> to vector<256x128xf32>
    %17 = arith.addf %15, %16 : vector<256x128xf32>
    %cst_13 = arith.constant 0.000000e+00 : f32
    %18 = vector.broadcast %cst_13 : f32 to vector<256x128xf32>
    %19 = arith.maximumf %17, %18 : vector<256x128xf32>
    %20 = arith.truncf %19 : vector<256x128xf32> to vector<256x128xbf16>
    %c1_14 = arith.constant 1 : index
    %c0_15 = arith.constant 0 : index
    %c0_16 = arith.constant 0 : index
    %21 = vector.load %arg5[%c1_14, %c0_15, %c0_16] : memref<2x256x128xbf16, #tpu.memory_space<vmem>>, vector<1x256x128xbf16>
    %22 = vector.shape_cast %21 : vector<1x256x128xbf16> to vector<256x128xbf16>
    %23 = vector.shape_cast %20 : vector<256x128xbf16> to vector<1x256x128xbf16>
    tpu.vector_store %arg5[%c1_14, %c0_15, %c0_16], %23 {strides = array<i32>} : memref<2x256x128xbf16, #tpu.memory_space<vmem>>, vector<1x256x128xbf16>,
    return
  }
  func.func @transform_0(%arg0: i32, %arg1: i32) -> (i32, i32) {
    %c0_i32 = arith.constant 0 : i32
    %c0_i32_0 = arith.constant 0 : i32
    return %arg1, %c0_i32 : i32, i32
  }
  func.func @transform_1(%arg0: i32, %arg1: i32) -> (i32, i32, i32) {
    %c0_i32 = arith.constant 0 : i32
    %c0_i32_0 = arith.constant 0 : i32
    %c0_i32_1 = arith.constant 0 : i32
    return %arg0, %c0_i32, %c0_i32_0 : i32, i32, i32
  }
  func.func @transform_2(%arg0: i32, %arg1: i32) -> (i32, i32) {
    %c0_i32 = arith.constant 0 : i32
    %c0_i32_0 = arith.constant 0 : i32
    %c0_i32_1 = arith.constant 0 : i32
    return %c0_i32, %c0_i32_0 : i32, i32
  }
  func.func @transform_3(%arg0: i32, %arg1: i32) -> (i32, i32, i32) {
    %c0_i32 = arith.constant 0 : i32
    %c0_i32_0 = arith.constant 0 : i32
    return %arg0, %arg1, %c0_i32 : i32, i32, i32
  }
}

</mosaic_0001>

<llo_original>
// kernel: tpu_custom_call.1
$region0: #{tpu_custom_call.1}
  #allocation0 [shape = 'u32[]', space=smem, size = 0x4, offset = 0x4, fixed_abs, tag = 'smem constant byte address 0x4 - core index']
  #allocation1 [shape = 'u32[144,128]{1,0:T(1,128)}', space=vmem, size = 0x12000, scoped, tag = 'internal scratch']
  %s0 = inlined_call_operand.hbm [shape: bf16[256,256], index: 0, kind: input, shape index: {}]
  %s1 = inlined_call_operand.hbm [shape: bf16[2,256,128], index: 1, kind: input, shape index: {}]
  %s2 = inlined_call_operand.vmem [shape: f32[1,128], index: 2, kind: input, shape index: {}]
  %s3 = inlined_call_operand.hbm [shape: bf16[2,256,128], index: 3, kind: output, shape index: {}]
  %s4 = sld [smem:[#allocation0]]
  $region30: #{tpu_custom_call.1} parent=0
    _
  %s6 = ssub.s32 1, %s4
  %s7 = scalar_select 0, %s6, %s4
  $region1: #{tpu_custom_call.1} parent=0
    #allocation2 [shape = 'u8[131072]{0}', space=vmem, size = 0x20000, scoped, tag = 'input window, operand 0, single buffered']
    #allocation3 [shape = 's32[1]{0}', space=sflag, size = 0x4, scoped, tag = 'scoped memory for tpu_custom_call.1']
    #allocation4 [shape = 's32[1]{0}', space=sflag, size = 0x4, scoped, tag = 'scoped memory for tpu_custom_call.1']
    #allocation5 [shape = 'u8[131072]{0}', space=vmem, size = 0x20000, scoped, tag = 'input window, operand 1, single buffered']
    #allocation6 [shape = 's32[1]{0}', space=sflag, size = 0x4, scoped, tag = 'scoped memory for tpu_custom_call.1']
    #allocation7 [shape = 'u8[131072]{0}', space=vmem, size = 0x20000, scoped, tag = 'output window, operand 0, single buffered']
    %8 = vsyncpa [#allocation3], 0
    %9 = vsyncpa [#allocation6], 0
    %10 = vsyncpa [#allocation4], 0
    // Predicated region
    $region2: #{tpu_custom_call.1} parent=1 // pred_check
      _
    $region3: #{tpu_custom_call.1} parent=1 // pred_check_branch
      %12 = sbr.rel (0) target = $region5
    $region4: #{tpu_custom_call.1} parent=1 // pred_region
      %s14 = ssub.s32 4096, 4096
      %15 = vsyncadd [#allocation3], %s14
      %s16 = sshll.u32 [#allocation2], 4
      %s17 = int_to_ptr.vmem [resolvable:$true] %s16
      %22 = dma.hbm_to_vmem [thread:$0]  %s0, 4096, %s17, [#allocation3], 128, 128, 8
    $region5: #{tpu_custom_call.1} parent=1 // pred_fallthru
      _
    // Predicated region
    $region6: #{tpu_custom_call.1} parent=1 // pred_check
      _
    $region7: #{tpu_custom_call.1} parent=1 // pred_check_branch
      %24 = sbr.rel (0) target = $region9
    $region8: #{tpu_custom_call.1} parent=1 // pred_region
      %s26 = ssub.s32 4096, 4096
      %27 = vsyncadd [#allocation6], %s26
      %s28 = sshll.u32 [#allocation5], 4
      %s29 = int_to_ptr.vmem [resolvable:$true] %s28
      %34 = dma.hbm_to_vmem [thread:$0]  %s1, 4096, %s29, [#allocation6], 64, 64, 4
    $region9: #{tpu_custom_call.1} parent=1 // pred_fallthru
      _
    // Predicated region
    $region10: #{tpu_custom_call.1} parent=1 // pred_check
      _
    $region11: #{tpu_custom_call.1} parent=1 // pred_check_branch
      %36 = sbr.rel (0) target = $region13
    $region12: #{tpu_custom_call.1} parent=1 // pred_region
      _
    $region13: #{tpu_custom_call.1} parent=1 // pred_fallthru
      _
    // Predicated region
    $region14: #{tpu_custom_call.1} parent=1 // pred_check
      _
    $region15: #{tpu_custom_call.1} parent=1 // pred_check_branch
      %38 = sbr.rel (0) target = $region17
    $region16: #{tpu_custom_call.1} parent=1 // pred_region
      %39 = dma.done [#allocation3], 4096
    $region17: #{tpu_custom_call.1} parent=1 // pred_fallthru
      _
    // Predicated region
    $region18: #{tpu_custom_call.1} parent=1 // pred_check
      _
    $region19: #{tpu_custom_call.1} parent=1 // pred_check_branch
      %41 = sbr.rel (0) target = $region21
    $region20: #{tpu_custom_call.1} parent=1 // pred_region
      %42 = dma.done [#allocation6], 4096
    $region21: #{tpu_custom_call.1} parent=1 // pred_fallthru
      _
    %v44 = vld [vmem:[#allocation2] sm:$0xff]
    %v45 = vld [vmem:[#allocation2 + $0x8] sm:$0xff]
    %v46 = vld [vmem:[#allocation2 + $0x10] sm:$0xff]
    %v47 = vld [vmem:[#allocation2 + $0x18] sm:$0xff]
    %v48 = vld [vmem:[#allocation2 + $0x20] sm:$0xff]
    %v49 = vld [vmem:[#allocation2 + $0x28] sm:$0xff]
    %v50 = vld [vmem:[#allocation2 + $0x30] sm:$0xff]
    %v51 = vld [vmem:[#allocation2 + $0x38] sm:$0xff]
    %v52 = vld [vmem:[#allocation2 + $0x40] sm:$0xff]
    %v53 = vld [vmem:[#allocation2 + $0x48] sm:$0xff]
    %v54 = vld [vmem:[#allocation2 + $0x50] sm:$0xff]
    %v55 = vld [vmem:[#allocation2 + $0x58] sm:$0xff]
    %v56 = vld [vmem:[#allocation2 + $0x60] sm:$0xff]
    %v57 = vld [vmem:[#allocation2 + $0x68] sm:$0xff]
    %v58 = vld [vmem:[#allocation2 + $0x70] sm:$0xff]
    %v59 = vld [vmem:[#allocation2 + $0x78] sm:$0xff]
    %v60 = vld [vmem:[#allocation2 + $0x80] sm:$0xff]
    %v61 = vld [vmem:[#allocation2 + $0x88] sm:$0xff]
    %v62 = vld [vmem:[#allocation2 + $0x90] sm:$0xff]
    %v63 = vld [vmem:[#allocation2 + $0x98] sm:$0xff]
    %v64 = vld [vmem:[#allocation2 + $0xa0] sm:$0xff]
    %v65 = vld [vmem:[#allocation2 + $0xa8] sm:$0xff]
    %v66 = vld [vmem:[#allocation2 + $0xb0] sm:$0xff]
    %v67 = vld [vmem:[#allocation2 + $0xb8] sm:$0xff]
    %v68 = vld [vmem:[#allocation2 + $0xc0] sm:$0xff]
    %v69 = vld [vmem:[#allocation2 + $0xc8] sm:$0xff]
    %v70 = vld [vmem:[#allocation2 + $0xd0] sm:$0xff]
    %v71 = vld [vmem:[#allocation2 + $0xd8] sm:$0xff]
    %v72 = vld [vmem:[#allocation2 + $0xe0] sm:$0xff]
    %v73 = vld [vmem:[#allocation2 + $0xe8] sm:$0xff]
    %v74 = vld [vmem:[#allocation2 + $0xf0] sm:$0xff]
    %v75 = vld [vmem:[#allocation2 + $0xf8] sm:$0xff]
    %v76 = vld [vmem:[%s2] sm:$0x1]
    %v77 = vld [vmem:[#allocation5] sm:$0xf]
    %v78 = vld [vmem:[#allocation5 + $0x4] sm:$0xf]
    %v79 = vld [vmem:[#allocation5 + $0x8] sm:$0xf]
    %v80 = vld [vmem:[#allocation5 + $0xc] sm:$0xf]
    %v81 = vld [vmem:[#allocation5 + $0x10] sm:$0xf]
    %v82 = vld [vmem:[#allocation5 + $0x14] sm:$0xf]
    %v83 = vld [vmem:[#allocation5 + $0x18] sm:$0xf]
    %v84 = vld [vmem:[#allocation5 + $0x1c] sm:$0xf]
    %v85 = vld [vmem:[#allocation5 + $0x20] sm:$0xf]
    %v86 = vld [vmem:[#allocation5 + $0x24] sm:$0xf]
    %v87 = vld [vmem:[#allocation5 + $0x28] sm:$0xf]
    %v88 = vld [vmem:[#allocation5 + $0x2c] sm:$0xf]
    %v89 = vld [vmem:[#allocation5 + $0x30] sm:$0xf]
    %v90 = vld [vmem:[#allocation5 + $0x34] sm:$0xf]
    %v91 = vld [vmem:[#allocation5 + $0x38] sm:$0xf]
    %v92 = vld [vmem:[#allocation5 + $0x3c] sm:$0xf]
    %v93 = vld [vmem:[#allocation5 + $0x40] sm:$0xf]
    %v94 = vld [vmem:[#allocation5 + $0x44] sm:$0xf]
    %v95 = vld [vmem:[#allocation5 + $0x48] sm:$0xf]
    %v96 = vld [vmem:[#allocation5 + $0x4c] sm:$0xf]
    %v97 = vld [vmem:[#allocation5 + $0x50] sm:$0xf]
    %v98 = vld [vmem:[#allocation5 + $0x54] sm:$0xf]
    %v99 = vld [vmem:[#allocation5 + $0x58] sm:$0xf]
    %v100 = vld [vmem:[#allocation5 + $0x5c] sm:$0xf]
    %v101 = vld [vmem:[#allocation5 + $0x60] sm:$0xf]
    %v102 = vld [vmem:[#allocation5 + $0x64] sm:$0xf]
    %v103 = vld [vmem:[#allocation5 + $0x68] sm:$0xf]
    %v104 = vld [vmem:[#allocation5 + $0x6c] sm:$0xf]
    %v105 = vld [vmem:[#allocation5 + $0x70] sm:$0xf]
    %v106 = vld [vmem:[#allocation5 + $0x74] sm:$0xf]
    %v107 = vld [vmem:[#allocation5 + $0x78] sm:$0xf]
    %v108 = vld [vmem:[#allocation5 + $0x7c] sm:$0xf]
    %v110 = vlaneseq
    %v111 = vshrl.u32 %v110, 7
    %v112 = vsub.s32 0, %v111
    %v113 = vrot.slane %v76, %v112
    %v147 = vunpack.c.l.b16 %v44
    %v148 = vunpack.c.h.b16 %v44
    %v149 = vunpack.c.l.b16 %v45
    %v150 = vunpack.c.h.b16 %v45
    %v151 = vunpack.c.l.b16 %v46
    %v152 = vunpack.c.h.b16 %v46
    %v153 = vunpack.c.l.b16 %v47
    %v154 = vunpack.c.h.b16 %v47
    %v155 = vunpack.c.l.b16 %v48
    %v156 = vunpack.c.h.b16 %v48
    %v157 = vunpack.c.l.b16 %v49
    %v158 = vunpack.c.h.b16 %v49
    %v159 = vunpack.c.l.b16 %v50
    %v160 = vunpack.c.h.b16 %v50
    %v161 = vunpack.c.l.b16 %v51
    %v162 = vunpack.c.h.b16 %v51
    %v163 = vunpack.c.l.b16 %v52
    %v164 = vunpack.c.h.b16 %v52
    %v165 = vunpack.c.l.b16 %v53
    %v166 = vunpack.c.h.b16 %v53
    %v167 = vunpack.c.l.b16 %v54
    %v168 = vunpack.c.h.b16 %v54
    %v169 = vunpack.c.l.b16 %v55
    %v170 = vunpack.c.h.b16 %v55
    %v171 = vunpack.c.l.b16 %v56
    %v172 = vunpack.c.h.b16 %v56
    %v173 = vunpack.c.l.b16 %v57
    %v174 = vunpack.c.h.b16 %v57
    %v175 = vunpack.c.l.b16 %v58
    %v176 = vunpack.c.h.b16 %v58
    %v177 = vunpack.c.l.b16 %v59
    %v178 = vunpack.c.h.b16 %v59
    %v179 = vunpack.c.l.b16 %v60
    %v180 = vunpack.c.h.b16 %v60
    %v181 = vunpack.c.l.b16 %v61
    %v182 = vunpack.c.h.b16 %v61
    %v183 = vunpack.c.l.b16 %v62
    %v184 = vunpack.c.h.b16 %v62
    %v185 = vunpack.c.l.b16 %v63
    %v186 = vunpack.c.h.b16 %v63
    %v187 = vunpack.c.l.b16 %v64
    %v188 = vunpack.c.h.b16 %v64
    %v189 = vunpack.c.l.b16 %v65
    %v190 = vunpack.c.h.b16 %v65
    %v191 = vunpack.c.l.b16 %v66
    %v192 = vunpack.c.h.b16 %v66
    %v193 = vunpack.c.l.b16 %v67
    %v194 = vunpack.c.h.b16 %v67
    %v195 = vunpack.c.l.b16 %v68
    %v196 = vunpack.c.h.b16 %v68
    %v197 = vunpack.c.l.b16 %v69
    %v198 = vunpack.c.h.b16 %v69
    %v199 = vunpack.c.l.b16 %v70
    %v200 = vunpack.c.h.b16 %v70
    %v201 = vunpack.c.l.b16 %v71
    %v202 = vunpack.c.h.b16 %v71
    %v203 = vunpack.c.l.b16 %v72
    %v204 = vunpack.c.h.b16 %v72
    %v205 = vunpack.c.l.b16 %v73
    %v206 = vunpack.c.h.b16 %v73
    %v207 = vunpack.c.l.b16 %v74
    %v208 = vunpack.c.h.b16 %v74
    %v209 = vunpack.c.l.b16 %v75
    %v210 = vunpack.c.h.b16 %v75
    %v211 = vpack.c.b16 %v149, %v147
    %v212 = vpack.c.b16 %v150, %v148
    %v213 = vpack.c.b16 %v153, %v151
    %v214 = vpack.c.b16 %v154, %v152
    %v215 = vpack.c.b16 %v157, %v155
    %v216 = vpack.c.b16 %v158, %v156
    %v217 = vpack.c.b16 %v161, %v159
    %v218 = vpack.c.b16 %v162, %v160
    %v219 = vpack.c.b16 %v165, %v163
    %v220 = vpack.c.b16 %v166, %v164
    %v221 = vpack.c.b16 %v169, %v167
    %v222 = vpack.c.b16 %v170, %v168
    %v223 = vpack.c.b16 %v173, %v171
    %v224 = vpack.c.b16 %v174, %v172
    %v225 = vpack.c.b16 %v177, %v175
    %v226 = vpack.c.b16 %v178, %v176
    %v227 = vpack.c.b16 %v181, %v179
    %v228 = vpack.c.b16 %v182, %v180
    %v229 = vpack.c.b16 %v185, %v183
    %v230 = vpack.c.b16 %v186, %v184
    %v231 = vpack.c.b16 %v189, %v187
    %v232 = vpack.c.b16 %v190, %v188
    %v233 = vpack.c.b16 %v193, %v191
    %v234 = vpack.c.b16 %v194, %v192
    %v235 = vpack.c.b16 %v197, %v195
    %v236 = vpack.c.b16 %v198, %v196
    %v237 = vpack.c.b16 %v201, %v199
    %v238 = vpack.c.b16 %v202, %v200
    %v239 = vpack.c.b16 %v205, %v203
    %v240 = vpack.c.b16 %v206, %v204
    %v241 = vpack.c.b16 %v209, %v207
    %v242 = vpack.c.b16 %v210, %v208
    %v307 = vunpack.c.l.b16 %v77
    %v308 = vunpack.c.l.b16 %v78
    %v309 = vunpack.c.l.b16 %v79
    %v310 = vunpack.c.l.b16 %v80
    %v311 = vunpack.c.l.b16 %v81
    %v312 = vunpack.c.l.b16 %v82
    %v313 = vunpack.c.l.b16 %v83
    %v314 = vunpack.c.l.b16 %v84
    %v315 = vunpack.c.l.b16 %v85
    %v316 = vunpack.c.l.b16 %v86
    %v317 = vunpack.c.l.b16 %v87
    %v318 = vunpack.c.l.b16 %v88
    %v319 = vunpack.c.l.b16 %v89
    %v320 = vunpack.c.l.b16 %v90
    %v321 = vunpack.c.l.b16 %v91
    %v322 = vunpack.c.l.b16 %v92
    %v323 = vunpack.c.l.b16 %v93
    %v324 = vunpack.c.l.b16 %v94
    %v325 = vunpack.c.l.b16 %v95
    %v326 = vunpack.c.l.b16 %v96
    %v327 = vunpack.c.l.b16 %v97
    %v328 = vunpack.c.l.b16 %v98
    %v329 = vunpack.c.l.b16 %v99
    %v330 = vunpack.c.l.b16 %v100
    %v331 = vunpack.c.l.b16 %v101
    %v332 = vunpack.c.l.b16 %v102
    %v333 = vunpack.c.l.b16 %v103
    %v334 = vunpack.c.l.b16 %v104
    %v335 = vunpack.c.l.b16 %v105
    %v336 = vunpack.c.l.b16 %v106
    %v337 = vunpack.c.l.b16 %v107
    %v338 = vunpack.c.l.b16 %v108
    %v339 = vpack.c.b16 %v308, %v307
    %v340 = vpack.c.b16 %v310, %v309
    %v341 = vpack.c.b16 %v312, %v311
    %v342 = vpack.c.b16 %v314, %v313
    %v343 = vpack.c.b16 %v316, %v315
    %v344 = vpack.c.b16 %v318, %v317
    %v345 = vpack.c.b16 %v320, %v319
    %v346 = vpack.c.b16 %v322, %v321
    %v347 = vpack.c.b16 %v324, %v323
    %v348 = vpack.c.b16 %v326, %v325
    %v349 = vpack.c.b16 %v328, %v327
    %v350 = vpack.c.b16 %v330, %v329
    %v351 = vpack.c.b16 %v332, %v331
    %v352 = vpack.c.b16 %v334, %v333
    %v353 = vpack.c.b16 %v336, %v335
    %v354 = vpack.c.b16 %v338, %v337
    %371 = vmatprep.subr.bf16.mxu0 0
    %372 = vmatpush1.bf16.msra.mxu0 %v339
    %373 = vmatprep.subr.bf16.mxu0 0
    %374 = vmatpush1.bf16.msra.mxu0 %v340
    %375 = vmatprep.subr.bf16.mxu0 0
    %376 = vmatpush1.bf16.msra.mxu0 %v341
    %377 = vmatprep.subr.bf16.mxu0 0
    %378 = vmatpush1.bf16.msra.mxu0 %v342
    %379 = vmatprep.subr.bf16.mxu0 0
    %380 = vmatpush1.bf16.msra.mxu0 %v343
    %381 = vmatprep.subr.bf16.mxu0 0
    %382 = vmatpush1.bf16.msra.mxu0 %v344
    %383 = vmatprep.subr.bf16.mxu0 0
    %384 = vmatpush1.bf16.msra.mxu0 %v345
    %385 = vmatprep.subr.bf16.mxu0 0
    %386 = vmatpush1.bf16.msra.mxu0 %v346
    %387 = vmatprep.subr.bf16.mxu0 0
    %388 = vmatpush1.bf16.msra.mxu0 %v347
    %389 = vmatprep.subr.bf16.mxu0 0
    %390 = vmatpush1.bf16.msra.mxu0 %v348
    %391 = vmatprep.subr.bf16.mxu0 0
    %392 = vmatpush1.bf16.msra.mxu0 %v349
    %393 = vmatprep.subr.bf16.mxu0 0
    %394 = vmatpush1.bf16.msra.mxu0 %v350
    %395 = vmatprep.subr.bf16.mxu0 0
    %396 = vmatpush1.bf16.msra.mxu0 %v351
    %397 = vmatprep.subr.bf16.mxu0 0
    %398 = vmatpush1.bf16.msra.mxu0 %v352
    %399 = vmatprep.subr.bf16.mxu0 0
    %400 = vmatpush1.bf16.msra.mxu0 %v353
    %401 = vmatprep.subr.bf16.mxu0 0
    %402 = vmatpush1.bf16.msra.mxu0 %v354
    %403 = vmatprep.mubr.bf16.mxu0 %v212
    %404 = vmatmul.mubr.bf16.gmra.mrb[0].mxu0 %v211
    %v405 = vpop.f32.mrb[0].mxu0
    %v406 = vadd.f32 %v113, %v405
    %v407 = vpop.f32.mrb[0].mxu0
    %v408 = vpop.f32.mrb[0].mxu0
    %v409 = vadd.f32 %v113, %v408
    %v410 = vpop.f32.mrb[0].mxu0
    %411 = vmatprep.mubr.bf16.mxu0 %v214
    %412 = vmatmul.mubr.bf16.gmra.mrb[0].mxu0 %v213
    %v413 = vpop.f32.mrb[0].mxu0
    %v414 = vadd.f32 %v113, %v413
    %v415 = vpop.f32.mrb[0].mxu0
    %v416 = vpop.f32.mrb[0].mxu0
    %v417 = vadd.f32 %v113, %v416
    %v418 = vpop.f32.mrb[0].mxu0
    %419 = vmatprep.mubr.bf16.mxu0 %v216
    %420 = vmatmul.mubr.bf16.gmra.mrb[0].mxu0 %v215
    %v421 = vpop.f32.mrb[0].mxu0
    %v422 = vadd.f32 %v113, %v421
    %v423 = vpop.f32.mrb[0].mxu0
    %v424 = vpop.f32.mrb[0].mxu0
    %v425 = vadd.f32 %v113, %v424
    %v426 = vpop.f32.mrb[0].mxu0
    %427 = vmatprep.mubr.bf16.mxu0 %v218
    %428 = vmatmul.mubr.bf16.gmra.mrb[0].mxu0 %v217
    %v429 = vpop.f32.mrb[0].mxu0
    %v430 = vadd.f32 %v113, %v429
    %v431 = vpop.f32.mrb[0].mxu0
    %v432 = vpop.f32.mrb[0].mxu0
    %v433 = vadd.f32 %v113, %v432
    %v434 = vpop.f32.mrb[0].mxu0
    %435 = vmatprep.mubr.bf16.mxu0 %v220
    %436 = vmatmul.mubr.bf16.gmra.mrb[0].mxu0 %v219
    %v437 = vpop.f32.mrb[0].mxu0
    %v438 = vadd.f32 %v113, %v437
    %v439 = vpop.f32.mrb[0].mxu0
    %v440 = vpop.f32.mrb[0].mxu0
    %v441 = vadd.f32 %v113, %v440
    %v442 = vpop.f32.mrb[0].mxu0
    %443 = vmatprep.mubr.bf16.mxu0 %v222
    %444 = vmatmul.mubr.bf16.gmra.mrb[0].mxu0 %v221
    %v445 = vpop.f32.mrb[0].mxu0
    %v446 = vadd.f32 %v113, %v445
    %v447 = vpop.f32.mrb[0].mxu0
    %v448 = vpop.f32.mrb[0].mxu0
    %v449 = vadd.f32 %v113, %v448
    %v450 = vpop.f32.mrb[0].mxu0
    %451 = vmatprep.mubr.bf16.mxu0 %v224
    %452 = vmatmul.mubr.bf16.gmra.mrb[0].mxu0 %v223
    %v453 = vpop.f32.mrb[0].mxu0
    %v454 = vadd.f32 %v113, %v453
    %v455 = vpop.f32.mrb[0].mxu0
    %v456 = vpop.f32.mrb[0].mxu0
    %v457 = vadd.f32 %v113, %v456
    %v458 = vpop.f32.mrb[0].mxu0
    %459 = vmatprep.mubr.bf16.mxu0 %v226
    %460 = vmatmul.mubr.bf16.gmra.mrb[0].mxu0 %v225
    %v461 = vpop.f32.mrb[0].mxu0
    %v462 = vadd.f32 %v113, %v461
    %v463 = vpop.f32.mrb[0].mxu0
    %v464 = vpop.f32.mrb[0].mxu0
    %v465 = vadd.f32 %v113, %v464
    %v466 = vpop.f32.mrb[0].mxu0
    %467 = vmatprep.mubr.bf16.mxu0 %v228
    %468 = vmatmul.mubr.bf16.gmra.mrb[0].mxu0 %v227
    %v469 = vpop.f32.mrb[0].mxu0
    %v470 = vadd.f32 %v113, %v469
    %v471 = vpop.f32.mrb[0].mxu0
    %v472 = vpop.f32.mrb[0].mxu0
    %v473 = vadd.f32 %v113, %v472
    %v474 = vpop.f32.mrb[0].mxu0
    %475 = vmatprep.mubr.bf16.mxu0 %v230
    %476 = vmatmul.mubr.bf16.gmra.mrb[0].mxu0 %v229
    %v477 = vpop.f32.mrb[0].mxu0
    %v478 = vadd.f32 %v113, %v477
    %v479 = vpop.f32.mrb[0].mxu0
    %v480 = vpop.f32.mrb[0].mxu0
    %v481 = vadd.f32 %v113, %v480
    %v482 = vpop.f32.mrb[0].mxu0
    %483 = vmatprep.mubr.bf16.mxu0 %v232
    %484 = vmatmul.mubr.bf16.gmra.mrb[0].mxu0 %v231
    %v485 = vpop.f32.mrb[0].mxu0
    %v486 = vadd.f32 %v113, %v485
    %v487 = vpop.f32.mrb[0].mxu0
    %v488 = vpop.f32.mrb[0].mxu0
    %v489 = vadd.f32 %v113, %v488
    %v490 = vpop.f32.mrb[0].mxu0
    %491 = vmatprep.mubr.bf16.mxu0 %v234
    %492 = vmatmul.mubr.bf16.gmra.mrb[0].mxu0 %v233
    %v493 = vpop.f32.mrb[0].mxu0
    %v494 = vadd.f32 %v113, %v493
    %v495 = vpop.f32.mrb[0].mxu0
    %v496 = vpop.f32.mrb[0].mxu0
    %v497 = vadd.f32 %v113, %v496
    %v498 = vpop.f32.mrb[0].mxu0
    %499 = vmatprep.mubr.bf16.mxu0 %v236
    %500 = vmatmul.mubr.bf16.gmra.mrb[0].mxu0 %v235
    %v501 = vpop.f32.mrb[0].mxu0
    %v502 = vadd.f32 %v113, %v501
    %v503 = vpop.f32.mrb[0].mxu0
    %v504 = vpop.f32.mrb[0].mxu0
    %v505 = vadd.f32 %v113, %v504
    %v506 = vpop.f32.mrb[0].mxu0
    %507 = vmatprep.mubr.bf16.mxu0 %v238
    %508 = vmatmul.mubr.bf16.gmra.mrb[0].mxu0 %v237
    %v509 = vpop.f32.mrb[0].mxu0
    %v510 = vadd.f32 %v113, %v509
    %v511 = vpop.f32.mrb[0].mxu0
    %v512 = vpop.f32.mrb[0].mxu0
    %v513 = vadd.f32 %v113, %v512
    %v514 = vpop.f32.mrb[0].mxu0
    %515 = vmatprep.mubr.bf16.mxu0 %v240
    %516 = vmatmul.mubr.bf16.gmra.mrb[0].mxu0 %v239
    %v517 = vpop.f32.mrb[0].mxu0
    %v518 = vadd.f32 %v113, %v517
    %v519 = vpop.f32.mrb[0].mxu0
    %v520 = vpop.f32.mrb[0].mxu0
    %v521 = vadd.f32 %v113, %v520
    %v522 = vpop.f32.mrb[0].mxu0
    %523 = vmatprep.mubr.bf16.mxu0 %v242
    %524 = vmatmul.mubr.bf16.gmra.mrb[0].mxu0 %v241
    %v525 = vpop.f32.mrb[0].mxu0
    %v526 = vadd.f32 %v113, %v525
    %v527 = vpop.f32.mrb[0].mxu0
    %v528 = vpop.f32.mrb[0].mxu0
    %v529 = vadd.f32 %v113, %v528
    %v530 = vpop.f32.mrb[0].mxu0
    %531 = vdwg.mxu0
    %v532 = vmax.f32 %v406, 0.0
    %v533 = vmax.f32 %v409, 0.0
    %v534 = vmax.f32 %v414, 0.0
    %v535 = vmax.f32 %v417, 0.0
    %v536 = vmax.f32 %v422, 0.0
    %v537 = vmax.f32 %v425, 0.0
    %v538 = vmax.f32 %v430, 0.0
    %v539 = vmax.f32 %v433, 0.0
    %v540 = vmax.f32 %v438, 0.0
    %v541 = vmax.f32 %v441, 0.0
    %v542 = vmax.f32 %v446, 0.0
    %v543 = vmax.f32 %v449, 0.0
    %v544 = vmax.f32 %v454, 0.0
    %v545 = vmax.f32 %v457, 0.0
    %v546 = vmax.f32 %v462, 0.0
    %v547 = vmax.f32 %v465, 0.0
    %v548 = vmax.f32 %v470, 0.0
    %v549 = vmax.f32 %v473, 0.0
    %v550 = vmax.f32 %v478, 0.0
    %v551 = vmax.f32 %v481, 0.0
    %v552 = vmax.f32 %v486, 0.0
    %v553 = vmax.f32 %v489, 0.0
    %v554 = vmax.f32 %v494, 0.0
    %v555 = vmax.f32 %v497, 0.0
    %v556 = vmax.f32 %v502, 0.0
    %v557 = vmax.f32 %v505, 0.0
    %v558 = vmax.f32 %v510, 0.0
    %v559 = vmax.f32 %v513, 0.0
    %v560 = vmax.f32 %v518, 0.0
    %v561 = vmax.f32 %v521, 0.0
    %v562 = vmax.f32 %v526, 0.0
    %v563 = vmax.f32 %v529, 0.0
    %v564 = vpack.c.bf16 %v533, %v532
    %v565 = vpack.c.bf16 %v535, %v534
    %v566 = vpack.c.bf16 %v537, %v536
    %v567 = vpack.c.bf16 %v539, %v538
    %v568 = vpack.c.bf16 %v541, %v540
    %v569 = vpack.c.bf16 %v543, %v542
    %v570 = vpack.c.bf16 %v545, %v544
    %v571 = vpack.c.bf16 %v547, %v546
    %v572 = vpack.c.bf16 %v549, %v548
    %v573 = vpack.c.bf16 %v551, %v550
    %v574 = vpack.c.bf16 %v553, %v552
    %v575 = vpack.c.bf16 %v555, %v554
    %v576 = vpack.c.bf16 %v557, %v556
    %v577 = vpack.c.bf16 %v559, %v558
    %v578 = vpack.c.bf16 %v561, %v560
    %v579 = vpack.c.bf16 %v563, %v562
    %v596 = vunpack.c.l.b16 %v564
    %v597 = vunpack.c.h.b16 %v564
    %v598 = vunpack.c.l.b16 %v565
    %v599 = vunpack.c.h.b16 %v565
    %v600 = vunpack.c.l.b16 %v566
    %v601 = vunpack.c.h.b16 %v566
    %v602 = vunpack.c.l.b16 %v567
    %v603 = vunpack.c.h.b16 %v567
    %v604 = vunpack.c.l.b16 %v568
    %v605 = vunpack.c.h.b16 %v568
    %v606 = vunpack.c.l.b16 %v569
    %v607 = vunpack.c.h.b16 %v569
    %v608 = vunpack.c.l.b16 %v570
    %v609 = vunpack.c.h.b16 %v570
    %v610 = vunpack.c.l.b16 %v571
    %v611 = vunpack.c.h.b16 %v571
    %v612 = vunpack.c.l.b16 %v572
    %v613 = vunpack.c.h.b16 %v572
    %v614 = vunpack.c.l.b16 %v573
    %v615 = vunpack.c.h.b16 %v573
    %v616 = vunpack.c.l.b16 %v574
    %v617 = vunpack.c.h.b16 %v574
    %v618 = vunpack.c.l.b16 %v575
    %v619 = vunpack.c.h.b16 %v575
    %v620 = vunpack.c.l.b16 %v576
    %v621 = vunpack.c.h.b16 %v576
    %v622 = vunpack.c.l.b16 %v577
    %v623 = vunpack.c.h.b16 %v577
    %v624 = vunpack.c.l.b16 %v578
    %v625 = vunpack.c.h.b16 %v578
    %v626 = vunpack.c.l.b16 %v579
    %v627 = vunpack.c.h.b16 %v579
    %v628 = vpack.c.b16 %v596, %v596
    %v629 = vpack.c.b16 %v597, %v597
    %v630 = vpack.c.b16 %v598, %v598
    %v631 = vpack.c.b16 %v599, %v599
    %v632 = vpack.c.b16 %v600, %v600
    %v633 = vpack.c.b16 %v601, %v601
    %v634 = vpack.c.b16 %v602, %v602
    %v635 = vpack.c.b16 %v603, %v603
    %v636 = vpack.c.b16 %v604, %v604
    %v637 = vpack.c.b16 %v605, %v605
    %v638 = vpack.c.b16 %v606, %v606
    %v639 = vpack.c.b16 %v607, %v607
    %v640 = vpack.c.b16 %v608, %v608
    %v641 = vpack.c.b16 %v609, %v609
    %v642 = vpack.c.b16 %v610, %v610
    %v643 = vpack.c.b16 %v611, %v611
    %v644 = vpack.c.b16 %v612, %v612
    %v645 = vpack.c.b16 %v613, %v613
    %v646 = vpack.c.b16 %v614, %v614
    %v647 = vpack.c.b16 %v615, %v615
    %v648 = vpack.c.b16 %v616, %v616
    %v649 = vpack.c.b16 %v617, %v617
    %v650 = vpack.c.b16 %v618, %v618
    %v651 = vpack.c.b16 %v619, %v619
    %v652 = vpack.c.b16 %v620, %v620
    %v653 = vpack.c.b16 %v621, %v621
    %v654 = vpack.c.b16 %v622, %v622
    %v655 = vpack.c.b16 %v623, %v623
    %v656 = vpack.c.b16 %v624, %v624
    %v657 = vpack.c.b16 %v625, %v625
    %v658 = vpack.c.b16 %v626, %v626
    %v659 = vpack.c.b16 %v627, %v627
    %692 = vst [vmem:[#allocation7] sm:$0xf] %v628
    %693 = vst [vmem:[#allocation7 + $0x4] sm:$0xf] %v629
    %694 = vst [vmem:[#allocation7 + $0x8] sm:$0xf] %v630
    %695 = vst [vmem:[#allocation7 + $0xc] sm:$0xf] %v631
    %696 = vst [vmem:[#allocation7 + $0x10] sm:$0xf] %v632
    %697 = vst [vmem:[#allocation7 + $0x14] sm:$0xf] %v633
    %698 = vst [vmem:[#allocation7 + $0x18] sm:$0xf] %v634
    %699 = vst [vmem:[#allocation7 + $0x1c] sm:$0xf] %v635
    %700 = vst [vmem:[#allocation7 + $0x20] sm:$0xf] %v636
    %701 = vst [vmem:[#allocation7 + $0x24] sm:$0xf] %v637
    %702 = vst [vmem:[#allocation7 + $0x28] sm:$0xf] %v638
    %703 = vst [vmem:[#allocation7 + $0x2c] sm:$0xf] %v639
    %704 = vst [vmem:[#allocation7 + $0x30] sm:$0xf] %v640
    %705 = vst [vmem:[#allocation7 + $0x34] sm:$0xf] %v641
    %706 = vst [vmem:[#allocation7 + $0x38] sm:$0xf] %v642
    %707 = vst [vmem:[#allocation7 + $0x3c] sm:$0xf] %v643
    %708 = vst [vmem:[#allocation7 + $0x40] sm:$0xf] %v644
    %709 = vst [vmem:[#allocation7 + $0x44] sm:$0xf] %v645
    %710 = vst [vmem:[#allocation7 + $0x48] sm:$0xf] %v646
    %711 = vst [vmem:[#allocation7 + $0x4c] sm:$0xf] %v647
    %712 = vst [vmem:[#allocation7 + $0x50] sm:$0xf] %v648
    %713 = vst [vmem:[#allocation7 + $0x54] sm:$0xf] %v649
    %714 = vst [vmem:[#allocation7 + $0x58] sm:$0xf] %v650
    %715 = vst [vmem:[#allocation7 + $0x5c] sm:$0xf] %v651
    %716 = vst [vmem:[#allocation7 + $0x60] sm:$0xf] %v652
    %717 = vst [vmem:[#allocation7 + $0x64] sm:$0xf] %v653
    %718 = vst [vmem:[#allocation7 + $0x68] sm:$0xf] %v654
    %719 = vst [vmem:[#allocation7 + $0x6c] sm:$0xf] %v655
    %720 = vst [vmem:[#allocation7 + $0x70] sm:$0xf] %v656
    %721 = vst [vmem:[#allocation7 + $0x74] sm:$0xf] %v657
    %722 = vst [vmem:[#allocation7 + $0x78] sm:$0xf] %v658
    %723 = vst [vmem:[#allocation7 + $0x7c] sm:$0xf] %v659
    %s724 = scalar_lea.vmem [#allocation5], 128
    %v725 = vld [vmem:[%s724] sm:$0xf]
    %v726 = vld [vmem:[%s724 + $0x4] sm:$0xf]
    %v727 = vld [vmem:[%s724 + $0x8] sm:$0xf]
    %v728 = vld [vmem:[%s724 + $0xc] sm:$0xf]
    %v729 = vld [vmem:[%s724 + $0x10] sm:$0xf]
    %v730 = vld [vmem:[%s724 + $0x14] sm:$0xf]
    %v731 = vld [vmem:[%s724 + $0x18] sm:$0xf]
    %v732 = vld [vmem:[%s724 + $0x1c] sm:$0xf]
    %v733 = vld [vmem:[%s724 + $0x20] sm:$0xf]
    %v734 = vld [vmem:[%s724 + $0x24] sm:$0xf]
    %v735 = vld [vmem:[%s724 + $0x28] sm:$0xf]
    %v736 = vld [vmem:[%s724 + $0x2c] sm:$0xf]
    %v737 = vld [vmem:[%s724 + $0x30] sm:$0xf]
    %v738 = vld [vmem:[%s724 + $0x34] sm:$0xf]
    %v739 = vld [vmem:[%s724 + $0x38] sm:$0xf]
    %v740 = vld [vmem:[%s724 + $0x3c] sm:$0xf]
    %v741 = vld [vmem:[%s724 + $0x40] sm:$0xf]
    %v742 = vld [vmem:[%s724 + $0x44] sm:$0xf]
    %v743 = vld [vmem:[%s724 + $0x48] sm:$0xf]
    %v744 = vld [vmem:[%s724 + $0x4c] sm:$0xf]
    %v745 = vld [vmem:[%s724 + $0x50] sm:$0xf]
    %v746 = vld [vmem:[%s724 + $0x54] sm:$0xf]
    %v747 = vld [vmem:[%s724 + $0x58] sm:$0xf]
    %v748 = vld [vmem:[%s724 + $0x5c] sm:$0xf]
    %v749 = vld [vmem:[%s724 + $0x60] sm:$0xf]
    %v750 = vld [vmem:[%s724 + $0x64] sm:$0xf]
    %v751 = vld [vmem:[%s724 + $0x68] sm:$0xf]
    %v752 = vld [vmem:[%s724 + $0x6c] sm:$0xf]
    %v753 = vld [vmem:[%s724 + $0x70] sm:$0xf]
    %v754 = vld [vmem:[%s724 + $0x74] sm:$0xf]
    %v755 = vld [vmem:[%s724 + $0x78] sm:$0xf]
    %v756 = vld [vmem:[%s724 + $0x7c] sm:$0xf]
    %v789 = vunpack.c.l.b16 %v725
    %v790 = vunpack.c.l.b16 %v726
    %v791 = vunpack.c.l.b16 %v727
    %v792 = vunpack.c.l.b16 %v728
    %v793 = vunpack.c.l.b16 %v729
    %v794 = vunpack.c.l.b16 %v730
    %v795 = vunpack.c.l.b16 %v731
    %v796 = vunpack.c.l.b16 %v732
    %v797 = vunpack.c.l.b16 %v733
    %v798 = vunpack.c.l.b16 %v734
    %v799 = vunpack.c.l.b16 %v735
    %v800 = vunpack.c.l.b16 %v736
    %v801 = vunpack.c.l.b16 %v737
    %v802 = vunpack.c.l.b16 %v738
    %v803 = vunpack.c.l.b16 %v739
    %v804 = vunpack.c.l.b16 %v740
    %v805 = vunpack.c.l.b16 %v741
    %v806 = vunpack.c.l.b16 %v742
    %v807 = vunpack.c.l.b16 %v743
    %v808 = vunpack.c.l.b16 %v744
    %v809 = vunpack.c.l.b16 %v745
    %v810 = vunpack.c.l.b16 %v746
    %v811 = vunpack.c.l.b16 %v747
    %v812 = vunpack.c.l.b16 %v748
    %v813 = vunpack.c.l.b16 %v749
    %v814 = vunpack.c.l.b16 %v750
    %v815 = vunpack.c.l.b16 %v751
    %v816 = vunpack.c.l.b16 %v752
    %v817 = vunpack.c.l.b16 %v753
    %v818 = vunpack.c.l.b16 %v754
    %v819 = vunpack.c.l.b16 %v755
    %v820 = vunpack.c.l.b16 %v756
    %v821 = vpack.c.b16 %v790, %v789
    %v822 = vpack.c.b16 %v792, %v791
    %v823 = vpack.c.b16 %v794, %v793
    %v824 = vpack.c.b16 %v796, %v795
    %v825 = vpack.c.b16 %v798, %v797
    %v826 = vpack.c.b16 %v800, %v799
    %v827 = vpack.c.b16 %v802, %v801
    %v828 = vpack.c.b16 %v804, %v803
    %v829 = vpack.c.b16 %v806, %v805
    %v830 = vpack.c.b16 %v808, %v807
    %v831 = vpack.c.b16 %v810, %v809
    %v832 = vpack.c.b16 %v812, %v811
    %v833 = vpack.c.b16 %v814, %v813
    %v834 = vpack.c.b16 %v816, %v815
    %v835 = vpack.c.b16 %v818, %v817
    %v836 = vpack.c.b16 %v820, %v819
    %853 = vmatprep.subr.bf16.mxu0 0
    %854 = vmatpush1.bf16.msra.mxu0 %v821
    %855 = vmatprep.subr.bf16.mxu0 0
    %856 = vmatpush1.bf16.msra.mxu0 %v822
    %857 = vmatprep.subr.bf16.mxu0 0
    %858 = vmatpush1.bf16.msra.mxu0 %v823
    %859 = vmatprep.subr.bf16.mxu0 0
    %860 = vmatpush1.bf16.msra.mxu0 %v824
    %861 = vmatprep.subr.bf16.mxu0 0
    %862 = vmatpush1.bf16.msra.mxu0 %v825
    %863 = vmatprep.subr.bf16.mxu0 0
    %864 = vmatpush1.bf16.msra.mxu0 %v826
    %865 = vmatprep.subr.bf16.mxu0 0
    %866 = vmatpush1.bf16.msra.mxu0 %v827
    %867 = vmatprep.subr.bf16.mxu0 0
    %868 = vmatpush1.bf16.msra.mxu0 %v828
    %869 = vmatprep.subr.bf16.mxu0 0
    %870 = vmatpush1.bf16.msra.mxu0 %v829
    %871 = vmatprep.subr.bf16.mxu0 0
    %872 = vmatpush1.bf16.msra.mxu0 %v830
    %873 = vmatprep.subr.bf16.mxu0 0
    %874 = vmatpush1.bf16.msra.mxu0 %v831
    %875 = vmatprep.subr.bf16.mxu0 0
    %876 = vmatpush1.bf16.msra.mxu0 %v832
    %877 = vmatprep.subr.bf16.mxu0 0
    %878 = vmatpush1.bf16.msra.mxu0 %v833
    %879 = vmatprep.subr.bf16.mxu0 0
    %880 = vmatpush1.bf16.msra.mxu0 %v834
    %881 = vmatprep.subr.bf16.mxu0 0
    %882 = vmatpush1.bf16.msra.mxu0 %v835
    %883 = vmatprep.subr.bf16.mxu0 0
    %884 = vmatpush1.bf16.msra.mxu0 %v836
    %885 = vmatprep.mubr.bf16.mxu0 %v212
    %886 = vmatmul.mubr.bf16.gmra.mrb[0].mxu0 %v211
    %v887 = vpop.f32.mrb[0].mxu0
    %v888 = vadd.f32 %v113, %v887
    %v889 = vpop.f32.mrb[0].mxu0
    %v890 = vpop.f32.mrb[0].mxu0
    %v891 = vadd.f32 %v113, %v890
    %v892 = vpop.f32.mrb[0].mxu0
    %893 = vmatprep.mubr.bf16.mxu0 %v214
    %894 = vmatmul.mubr.bf16.gmra.mrb[0].mxu0 %v213
    %v895 = vpop.f32.mrb[0].mxu0
    %v896 = vadd.f32 %v113, %v895
    %v897 = vpop.f32.mrb[0].mxu0
    %v898 = vpop.f32.mrb[0].mxu0
    %v899 = vadd.f32 %v113, %v898
    %v900 = vpop.f32.mrb[0].mxu0
    %901 = vmatprep.mubr.bf16.mxu0 %v216
    %902 = vmatmul.mubr.bf16.gmra.mrb[0].mxu0 %v215
    %v903 = vpop.f32.mrb[0].mxu0
    %v904 = vadd.f32 %v113, %v903
    %v905 = vpop.f32.mrb[0].mxu0
    %v906 = vpop.f32.mrb[0].mxu0
    %v907 = vadd.f32 %v113, %v906
    %v908 = vpop.f32.mrb[0].mxu0
    %909 = vmatprep.mubr.bf16.mxu0 %v218
    %910 = vmatmul.mubr.bf16.gmra.mrb[0].mxu0 %v217
    %v911 = vpop.f32.mrb[0].mxu0
    %v912 = vadd.f32 %v113, %v911
    %v913 = vpop.f32.mrb[0].mxu0
    %v914 = vpop.f32.mrb[0].mxu0
    %v915 = vadd.f32 %v113, %v914
    %v916 = vpop.f32.mrb[0].mxu0
    %917 = vmatprep.mubr.bf16.mxu0 %v220
    %918 = vmatmul.mubr.bf16.gmra.mrb[0].mxu0 %v219
    %v919 = vpop.f32.mrb[0].mxu0
    %v920 = vadd.f32 %v113, %v919
    %v921 = vpop.f32.mrb[0].mxu0
    %v922 = vpop.f32.mrb[0].mxu0
    %v923 = vadd.f32 %v113, %v922
    %v924 = vpop.f32.mrb[0].mxu0
    %925 = vmatprep.mubr.bf16.mxu0 %v222
    %926 = vmatmul.mubr.bf16.gmra.mrb[0].mxu0 %v221
    %v927 = vpop.f32.mrb[0].mxu0
    %v928 = vadd.f32 %v113, %v927
    %v929 = vpop.f32.mrb[0].mxu0
    %v930 = vpop.f32.mrb[0].mxu0
    %v931 = vadd.f32 %v113, %v930
    %v932 = vpop.f32.mrb[0].mxu0
    %933 = vmatprep.mubr.bf16.mxu0 %v224
    %934 = vmatmul.mubr.bf16.gmra.mrb[0].mxu0 %v223
    %v935 = vpop.f32.mrb[0].mxu0
    %v936 = vadd.f32 %v113, %v935
    %v937 = vpop.f32.mrb[0].mxu0
    %v938 = vpop.f32.mrb[0].mxu0
    %v939 = vadd.f32 %v113, %v938
    %v940 = vpop.f32.mrb[0].mxu0
    %941 = vmatprep.mubr.bf16.mxu0 %v226
    %942 = vmatmul.mubr.bf16.gmra.mrb[0].mxu0 %v225
    %v943 = vpop.f32.mrb[0].mxu0
    %v944 = vadd.f32 %v113, %v943
    %v945 = vpop.f32.mrb[0].mxu0
    %v946 = vpop.f32.mrb[0].mxu0
    %v947 = vadd.f32 %v113, %v946
    %v948 = vpop.f32.mrb[0].mxu0
    %949 = vmatprep.mubr.bf16.mxu0 %v228
    %950 = vmatmul.mubr.bf16.gmra.mrb[0].mxu0 %v227
    %v951 = vpop.f32.mrb[0].mxu0
    %v952 = vadd.f32 %v113, %v951
    %v953 = vpop.f32.mrb[0].mxu0
    %v954 = vpop.f32.mrb[0].mxu0
    %v955 = vadd.f32 %v113, %v954
    %v956 = vpop.f32.mrb[0].mxu0
    %957 = vmatprep.mubr.bf16.mxu0 %v230
    %958 = vmatmul.mubr.bf16.gmra.mrb[0].mxu0 %v229
    %v959 = vpop.f32.mrb[0].mxu0
    %v960 = vadd.f32 %v113, %v959
    %v961 = vpop.f32.mrb[0].mxu0
    %v962 = vpop.f32.mrb[0].mxu0
    %v963 = vadd.f32 %v113, %v962
    %v964 = vpop.f32.mrb[0].mxu0
    %965 = vmatprep.mubr.bf16.mxu0 %v232
    %966 = vmatmul.mubr.bf16.gmra.mrb[0].mxu0 %v231
    %v967 = vpop.f32.mrb[0].mxu0
    %v968 = vadd.f32 %v113, %v967
    %v969 = vpop.f32.mrb[0].mxu0
    %v970 = vpop.f32.mrb[0].mxu0
    %v971 = vadd.f32 %v113, %v970
    %v972 = vpop.f32.mrb[0].mxu0
    %973 = vmatprep.mubr.bf16.mxu0 %v234
    %974 = vmatmul.mubr.bf16.gmra.mrb[0].mxu0 %v233
    %v975 = vpop.f32.mrb[0].mxu0
    %v976 = vadd.f32 %v113, %v975
    %v977 = vpop.f32.mrb[0].mxu0
    %v978 = vpop.f32.mrb[0].mxu0
    %v979 = vadd.f32 %v113, %v978
    %v980 = vpop.f32.mrb[0].mxu0
    %981 = vmatprep.mubr.bf16.mxu0 %v236
    %982 = vmatmul.mubr.bf16.gmra.mrb[0].mxu0 %v235
    %v983 = vpop.f32.mrb[0].mxu0
    %v984 = vadd.f32 %v113, %v983
    %v985 = vpop.f32.mrb[0].mxu0
    %v986 = vpop.f32.mrb[0].mxu0
    %v987 = vadd.f32 %v113, %v986
    %v988 = vpop.f32.mrb[0].mxu0
    %989 = vmatprep.mubr.bf16.mxu0 %v238
    %990 = vmatmul.mubr.bf16.gmra.mrb[0].mxu0 %v237
    %v991 = vpop.f32.mrb[0].mxu0
    %v992 = vadd.f32 %v113, %v991
    %v993 = vpop.f32.mrb[0].mxu0
    %v994 = vpop.f32.mrb[0].mxu0
    %v995 = vadd.f32 %v113, %v994
    %v996 = vpop.f32.mrb[0].mxu0
    %997 = vmatprep.mubr.bf16.mxu0 %v240
    %998 = vmatmul.mubr.bf16.gmra.mrb[0].mxu0 %v239
    %v999 = vpop.f32.mrb[0].mxu0
    %v1000 = vadd.f32 %v113, %v999
    %v1001 = vpop.f32.mrb[0].mxu0
    %v1002 = vpop.f32.mrb[0].mxu0
    %v1003 = vadd.f32 %v113, %v1002
    %v1004 = vpop.f32.mrb[0].mxu0
    %1005 = vmatprep.mubr.bf16.mxu0 %v242
    %1006 = vmatmul.mubr.bf16.gmra.mrb[0].mxu0 %v241
    %v1007 = vpop.f32.mrb[0].mxu0
    %v1008 = vadd.f32 %v113, %v1007
    %v1009 = vpop.f32.mrb[0].mxu0
    %v1010 = vpop.f32.mrb[0].mxu0
    %v1011 = vadd.f32 %v113, %v1010
    %v1012 = vpop.f32.mrb[0].mxu0
    %1013 = vdwg.mxu0
    %v1014 = vmax.f32 %v888, 0.0
    %v1015 = vmax.f32 %v891, 0.0
    %v1016 = vmax.f32 %v896, 0.0
    %v1017 = vmax.f32 %v899, 0.0
    %v1018 = vmax.f32 %v904, 0.0
    %v1019 = vmax.f32 %v907, 0.0
    %v1020 = vmax.f32 %v912, 0.0
    %v1021 = vmax.f32 %v915, 0.0
    %v1022 = vmax.f32 %v920, 0.0
    %v1023 = vmax.f32 %v923, 0.0
    %v1024 = vmax.f32 %v928, 0.0
    %v1025 = vmax.f32 %v931, 0.0
    %v1026 = vmax.f32 %v936, 0.0
    %v1027 = vmax.f32 %v939, 0.0
    %v1028 = vmax.f32 %v944, 0.0
    %v1029 = vmax.f32 %v947, 0.0
    %v1030 = vmax.f32 %v952, 0.0
    %v1031 = vmax.f32 %v955, 0.0
    %v1032 = vmax.f32 %v960, 0.0
    %v1033 = vmax.f32 %v963, 0.0
    %v1034 = vmax.f32 %v968, 0.0
    %v1035 = vmax.f32 %v971, 0.0
    %v1036 = vmax.f32 %v976, 0.0
    %v1037 = vmax.f32 %v979, 0.0
    %v1038 = vmax.f32 %v984, 0.0
    %v1039 = vmax.f32 %v987, 0.0
    %v1040 = vmax.f32 %v992, 0.0
    %v1041 = vmax.f32 %v995, 0.0
    %v1042 = vmax.f32 %v1000, 0.0
    %v1043 = vmax.f32 %v1003, 0.0
    %v1044 = vmax.f32 %v1008, 0.0
    %v1045 = vmax.f32 %v1011, 0.0
    %v1046 = vpack.c.bf16 %v1015, %v1014
    %v1047 = vpack.c.bf16 %v1017, %v1016
    %v1048 = vpack.c.bf16 %v1019, %v1018
    %v1049 = vpack.c.bf16 %v1021, %v1020
    %v1050 = vpack.c.bf16 %v1023, %v1022
    %v1051 = vpack.c.bf16 %v1025, %v1024
    %v1052 = vpack.c.bf16 %v1027, %v1026
    %v1053 = vpack.c.bf16 %v1029, %v1028
    %v1054 = vpack.c.bf16 %v1031, %v1030
    %v1055 = vpack.c.bf16 %v1033, %v1032
    %v1056 = vpack.c.bf16 %v1035, %v1034
    %v1057 = vpack.c.bf16 %v1037, %v1036
    %v1058 = vpack.c.bf16 %v1039, %v1038
    %v1059 = vpack.c.bf16 %v1041, %v1040
    %v1060 = vpack.c.bf16 %v1043, %v1042
    %v1061 = vpack.c.bf16 %v1045, %v1044
    %v1078 = vunpack.c.l.b16 %v1046
    %v1079 = vunpack.c.h.b16 %v1046
    %v1080 = vunpack.c.l.b16 %v1047
    %v1081 = vunpack.c.h.b16 %v1047
    %v1082 = vunpack.c.l.b16 %v1048
    %v1083 = vunpack.c.h.b16 %v1048
    %v1084 = vunpack.c.l.b16 %v1049
    %v1085 = vunpack.c.h.b16 %v1049
    %v1086 = vunpack.c.l.b16 %v1050
    %v1087 = vunpack.c.h.b16 %v1050
    %v1088 = vunpack.c.l.b16 %v1051
    %v1089 = vunpack.c.h.b16 %v1051
    %v1090 = vunpack.c.l.b16 %v1052
    %v1091 = vunpack.c.h.b16 %v1052
    %v1092 = vunpack.c.l.b16 %v1053
    %v1093 = vunpack.c.h.b16 %v1053
    %v1094 = vunpack.c.l.b16 %v1054
    %v1095 = vunpack.c.h.b16 %v1054
    %v1096 = vunpack.c.l.b16 %v1055
    %v1097 = vunpack.c.h.b16 %v1055
    %v1098 = vunpack.c.l.b16 %v1056
    %v1099 = vunpack.c.h.b16 %v1056
    %v1100 = vunpack.c.l.b16 %v1057
    %v1101 = vunpack.c.h.b16 %v1057
    %v1102 = vunpack.c.l.b16 %v1058
    %v1103 = vunpack.c.h.b16 %v1058
    %v1104 = vunpack.c.l.b16 %v1059
    %v1105 = vunpack.c.h.b16 %v1059
    %v1106 = vunpack.c.l.b16 %v1060
    %v1107 = vunpack.c.h.b16 %v1060
    %v1108 = vunpack.c.l.b16 %v1061
    %v1109 = vunpack.c.h.b16 %v1061
    %v1110 = vpack.c.b16 %v1078, %v1078
    %v1111 = vpack.c.b16 %v1079, %v1079
    %v1112 = vpack.c.b16 %v1080, %v1080
    %v1113 = vpack.c.b16 %v1081, %v1081
    %v1114 = vpack.c.b16 %v1082, %v1082
    %v1115 = vpack.c.b16 %v1083, %v1083
    %v1116 = vpack.c.b16 %v1084, %v1084
    %v1117 = vpack.c.b16 %v1085, %v1085
    %v1118 = vpack.c.b16 %v1086, %v1086
    %v1119 = vpack.c.b16 %v1087, %v1087
    %v1120 = vpack.c.b16 %v1088, %v1088
    %v1121 = vpack.c.b16 %v1089, %v1089
    %v1122 = vpack.c.b16 %v1090, %v1090
    %v1123 = vpack.c.b16 %v1091, %v1091
    %v1124 = vpack.c.b16 %v1092, %v1092
    %v1125 = vpack.c.b16 %v1093, %v1093
    %v1126 = vpack.c.b16 %v1094, %v1094
    %v1127 = vpack.c.b16 %v1095, %v1095
    %v1128 = vpack.c.b16 %v1096, %v1096
    %v1129 = vpack.c.b16 %v1097, %v1097
    %v1130 = vpack.c.b16 %v1098, %v1098
    %v1131 = vpack.c.b16 %v1099, %v1099
    %v1132 = vpack.c.b16 %v1100, %v1100
    %v1133 = vpack.c.b16 %v1101, %v1101
    %v1134 = vpack.c.b16 %v1102, %v1102
    %v1135 = vpack.c.b16 %v1103, %v1103
    %v1136 = vpack.c.b16 %v1104, %v1104
    %v1137 = vpack.c.b16 %v1105, %v1105
    %v1138 = vpack.c.b16 %v1106, %v1106
    %v1139 = vpack.c.b16 %v1107, %v1107
    %v1140 = vpack.c.b16 %v1108, %v1108
    %v1141 = vpack.c.b16 %v1109, %v1109
    %s1174 = scalar_lea.vmem [#allocation7], 128
    %1175 = vst [vmem:[%s1174] sm:$0xf] %v1110
    %1176 = vst [vmem:[%s1174 + $0x4] sm:$0xf] %v1111
    %1177 = vst [vmem:[%s1174 + $0x8] sm:$0xf] %v1112
    %1178 = vst [vmem:[%s1174 + $0xc] sm:$0xf] %v1113
    %1179 = vst [vmem:[%s1174 + $0x10] sm:$0xf] %v1114
    %1180 = vst [vmem:[%s1174 + $0x14] sm:$0xf] %v1115
    %1181 = vst [vmem:[%s1174 + $0x18] sm:$0xf] %v1116
    %1182 = vst [vmem:[%s1174 + $0x1c] sm:$0xf] %v1117
    %1183 = vst [vmem:[%s1174 + $0x20] sm:$0xf] %v1118
    %1184 = vst [vmem:[%s1174 + $0x24] sm:$0xf] %v1119
    %1185 = vst [vmem:[%s1174 + $0x28] sm:$0xf] %v1120
    %1186 = vst [vmem:[%s1174 + $0x2c] sm:$0xf] %v1121
    %1187 = vst [vmem:[%s1174 + $0x30] sm:$0xf] %v1122
    %1188 = vst [vmem:[%s1174 + $0x34] sm:$0xf] %v1123
    %1189 = vst [vmem:[%s1174 + $0x38] sm:$0xf] %v1124
    %1190 = vst [vmem:[%s1174 + $0x3c] sm:$0xf] %v1125
    %1191 = vst [vmem:[%s1174 + $0x40] sm:$0xf] %v1126
    %1192 = vst [vmem:[%s1174 + $0x44] sm:$0xf] %v1127
    %1193 = vst [vmem:[%s1174 + $0x48] sm:$0xf] %v1128
    %1194 = vst [vmem:[%s1174 + $0x4c] sm:$0xf] %v1129
    %1195 = vst [vmem:[%s1174 + $0x50] sm:$0xf] %v1130
    %1196 = vst [vmem:[%s1174 + $0x54] sm:$0xf] %v1131
    %1197 = vst [vmem:[%s1174 + $0x58] sm:$0xf] %v1132
    %1198 = vst [vmem:[%s1174 + $0x5c] sm:$0xf] %v1133
    %1199 = vst [vmem:[%s1174 + $0x60] sm:$0xf] %v1134
    %1200 = vst [vmem:[%s1174 + $0x64] sm:$0xf] %v1135
    %1201 = vst [vmem:[%s1174 + $0x68] sm:$0xf] %v1136
    %1202 = vst [vmem:[%s1174 + $0x6c] sm:$0xf] %v1137
    %1203 = vst [vmem:[%s1174 + $0x70] sm:$0xf] %v1138
    %1204 = vst [vmem:[%s1174 + $0x74] sm:$0xf] %v1139
    %1205 = vst [vmem:[%s1174 + $0x78] sm:$0xf] %v1140
    %1206 = vst [vmem:[%s1174 + $0x7c] sm:$0xf] %v1141
    // Predicated region
    $region22: #{tpu_custom_call.1} parent=1 // pred_check
      _
    $region23: #{tpu_custom_call.1} parent=1 // pred_check_branch
      %1208 = sbr.rel (0) target = $region25
    $region24: #{tpu_custom_call.1} parent=1 // pred_region
      %s1210 = ssub.s32 4096, 4096
      %1211 = vsyncadd [#allocation4], %s1210
      %s1212 = sshll.u32 [#allocation7], 4
      %s1213 = int_to_ptr.vmem [resolvable:$true] %s1212
      %1218 = dma.vmem_to_hbm [thread:$0]  %s1213, 4096, %s3, [#allocation4], 64, 64, 4
    $region25: #{tpu_custom_call.1} parent=1 // pred_fallthru
      _
    // Predicated region
    $region26: #{tpu_custom_call.1} parent=1 // pred_check
      _
    $region27: #{tpu_custom_call.1} parent=1 // pred_check_branch
      %1220 = sbr.rel (0) target = $region29
    $region28: #{tpu_custom_call.1} parent=1 // pred_region
      %1221 = dma.done [#allocation4], 4096
    $region29: #{tpu_custom_call.1} parent=1 // pred_fallthru
      _
    %1222 = vsyncpa [#allocation3], 1
    %1223 = vsyncpa [#allocation6], 1
    %1224 = vsyncpa [#allocation4], 1

</llo_original>
